<compile_context>
chip_gen: v6e
topology: v6e:2x2x1
jax: 0.10.0
libtpu: 0.0.40
codegen_flags: <defaults>
</compile_context>

<pallas_src>
import jax
import jax.numpy as jnp
from jax.experimental import pallas as pl
from jax.experimental.pallas import tpu as pltpu


def _round_up(x, m):
    return ((x + m - 1) // m) * m


# --------------------------------------------------------------------------- #
# Kernel: out = relu(x @ W1 + b1) @ [Wm | Wv] + [bm | bv]   (one fused matmul)
# --------------------------------------------------------------------------- #
def encoder_kernel(x_ref, w1_ref, b1_ref, wh_ref, bh_ref, out_ref):
    # Cast the streamed activation to the weight dtype (bf16 by default) so the
    # first matmul hits the bf16 MXU rate; accumulate in f32.
    x = x_ref[...].astype(w1_ref.dtype)
    h1 = jnp.dot(x, w1_ref[...], preferred_element_type=jnp.float32)
    h1 = jnp.maximum(h1 + b1_ref[...], 0.0)
    # Cast h1 back down before the fused head matmul (avoids promoting the
    # resident head weight to f32 and falling off the bf16 MXU path).
    h1 = h1.astype(wh_ref.dtype)
    out_ref[...] = (
        jnp.dot(h1, wh_ref[...], preferred_element_type=jnp.float32) + bh_ref[...]
    ).astype(out_ref.dtype)


# --------------------------------------------------------------------------- #
# One-time weight preparation (pad/fuse/cast) — cache the result across calls.
# --------------------------------------------------------------------------- #
def prepare_params(params, *, use_bf16=True):
    w1, b1 = params["w1"], params["b1"]        # (input_dim, h_dim), (1, h_dim)
    wm, bm = params["wm"], params["bm"]        # (h_dim, latent),   (1, latent)
    wv, bv = params["wv"], params["bv"]
    input_dim, h_dim = w1.shape
    latent_dim = wm.shape[1]

    H = _round_up(h_dim, 128)
    off = _round_up(latent_dim, 128)           # 128-aligned var column offset
    N = 2 * off                                # [mean | pad | var | pad]
    wdt = jnp.bfloat16 if use_bf16 else jnp.float32

    w1p = jnp.zeros((input_dim, H), jnp.float32).at[:, :h_dim].set(w1).astype(wdt)
    b1p = jnp.zeros((1, H), jnp.float32).at[:, :h_dim].set(b1)          # f32 bias
    whp = jnp.zeros((H, N), jnp.float32)
    whp = whp.at[:h_dim, :latent_dim].set(wm)
    whp = whp.at[:h_dim, off:off + latent_dim].set(wv)
    whp = whp.astype(wdt)
    bhp = jnp.zeros((1, N), jnp.float32)
    bhp = bhp.at[:, :latent_dim].set(bm)
    bhp = bhp.at[:, off:off + latent_dim].set(bv)

    return {"w1p": w1p, "b1p": b1p, "whp": whp, "bhp": bhp,
            "latent_dim": latent_dim, "offset": off}


# --------------------------------------------------------------------------- #
# Generation-aware VMEM budgeting and batch-tile selection.
# --------------------------------------------------------------------------- #
def _vmem_budget():
    try:
        cap = int(pltpu.get_tpu_info().vmem_capacity_bytes)
    except Exception:
        cap = 64 << 20                 # conservative fallback (v7x per-TC VMEM)
    budget = int(cap * 0.6)            # ~77 MiB on v5e/v6e, ~38 MiB on v7x
    limit = min(int(cap * 0.8), 112 << 20)
    return budget, limit


def _choose_tile_b(K, H, N, x_bytes, w_bytes, budget_bytes):
    # Resident weights/biases (single-buffered via pl.Buffered(1)).
    resident = (K * H + H * N) * w_bytes + (H + N) * 4
    # Per batch-row VMEM: double-buffered x block, double-buffered f32 out block,
    # the f32 h1 intermediate, plus in-kernel bf16 copies of x and h1.
    per_row = 2 * K * x_bytes + 2 * N * 4 + H * 4 + (K + H) * w_bytes
    avail = budget_bytes - resident - (2 << 20)    # 2 MiB headroom for internals
    avail = max(avail, per_row * 128)
    tile = avail // per_row
    if tile >= 256:
        tile = (tile // 256) * 256     # 256-row multiples feed the 256-wide MXU
    else:
        tile = max(128, (tile // 8) * 8)
    return int(min(tile, 1024))


# --------------------------------------------------------------------------- #
# Forward wrapper.
# --------------------------------------------------------------------------- #
def encoder_v2_forward(x, prepared, *, tile_b=None):
    """x: (B, input_dim).  prepared: output of prepare_params.
    Returns (mean, var), each (B, latent_dim) float32."""
    B, input_dim = x.shape
    w1p, b1p = prepared["w1p"], prepared["b1p"]
    whp, bhp = prepared["whp"], prepared["bhp"]
    latent_dim, off = prepared["latent_dim"], prepared["offset"]
    K, H = w1p.shape
    N = whp.shape[1]
    assert K == input_dim, "input_dim mismatch with prepared params"

    budget, vmem_limit = _vmem_budget()
    if tile_b is None:
        tile_b = _choose_tile_b(K, H, N, jnp.dtype(x.dtype).itemsize,
                                jnp.dtype(w1p.dtype).itemsize, budget)
    # Guarantee >=2 grid steps (megacore sharding) once the batch is big enough
    # that each step still feeds the MXU >=128 rows.
    if B >= 256:
        tile_b = min(tile_b, _round_up(pl.cdiv(B, 2), 128))
    # Never use a tile taller than the (8-aligned) batch itself.
    tile_b = min(tile_b, _round_up(B, 8))
    tile_b = max(8, (tile_b // 8) * 8)

    grid = (pl.cdiv(B, tile_b),)   # tail block: OOB rows masked on writeback

    def run(single_buffer_weights):
        resident_kw = (dict(pipeline_mode=pl.Buffered(1))
                       if single_buffer_weights else {})
        return pl.pallas_call(
            encoder_kernel,
            out_shape=jax.ShapeDtypeStruct((B, N), jnp.float32),
            grid=grid,
            in_specs=[
                pl.BlockSpec((tile_b, K), lambda i: (i, 0)),            # x streamed
                pl.BlockSpec((K, H), lambda i: (0, 0), **resident_kw),  # W1 resident
                pl.BlockSpec((1, H), lambda i: (0, 0), **resident_kw),  # b1 resident
                pl.BlockSpec((H, N), lambda i: (0, 0), **resident_kw),  # [Wm|Wv]
                pl.BlockSpec((1, N), lambda i: (0, 0), **resident_kw),  # [bm|bv]
            ],
            out_specs=pl.BlockSpec((tile_b, N), lambda i: (i, 0)),
            compiler_params=pltpu.CompilerParams(
                dimension_semantics=("parallel",),
                vmem_limit_bytes=vmem_limit),
        )(x, w1p, b1p, whp, bhp)

    try:
        out = run(True)
    except Exception:
        # Fallback for jax versions without pipeline_mode / Buffered support:
        # default double-buffered resident weights (identical results).
        out = run(False)

    mean = out[:, :latent_dim]                 # lane-aligned slice (offset 0)
    var = out[:, off:off + latent_dim]         # lane-aligned slice (128-mult offset)
    return mean, var


# --------------------------------------------------------------------------- #
# Deterministic init mimicking nn.Linear's U(-1/sqrt(fan_in), 1/sqrt(fan_in)).
# Weights are stored as (in_features, out_features).
# --------------------------------------------------------------------------- #
def init_params(key, input_dim, h_dim, latent_dim):
    ks = jax.random.split(key, 6)

    def lin(kw, kb, fan_in, fan_out):
        bound = 1.0 / jnp.sqrt(fan_in)
        w = jax.random.uniform(kw, (fan_in, fan_out), jnp.float32, -bound, bound)
        b = jax.random.uniform(kb, (1, fan_out), jnp.float32, -bound, bound)
        return w, b

    w1, b1 = lin(ks[0], ks[1], input_dim, h_dim)
    wm, bm = lin(ks[2], ks[3], h_dim, latent_dim)
    wv, bv = lin(ks[4], ks[5], h_dim, latent_dim)
    return {"w1": w1, "b1": b1, "wm": wm, "bm": bm, "wv": wv, "bv": bv}


if __name__ == "__main__":
    input_dim, h_dim, latent_dim = 32, 64, 16
    batch = 8

    key = jax.random.PRNGKey(0)
    kx, kp = jax.random.split(key)
    x = jax.random.normal(kx, (batch, input_dim), dtype=jnp.float32)
    params = init_params(kp, input_dim, h_dim, latent_dim)

    # Pure-JAX reference of the forward semantics.
    h1_ref = jnp.maximum(x @ params["w1"] + params["b1"], 0.0)
    mean_ref = h1_ref @ params["wm"] + params["bm"]
    var_ref = h1_ref @ params["wv"] + params["bv"]

    # Default path: bf16 weights/activations, f32 accumulation (loose tolerance).
    prep_bf16 = prepare_params(params, use_bf16=True)
    mean, var = encoder_v2_forward(x, prep_bf16)
    jax.block_until_ready((mean, var))
    assert mean.shape == (batch, latent_dim) and var.shape == (batch, latent_dim)
    assert jnp.allclose(mean, mean_ref, atol=5e-2, rtol=5e-2), "bf16 mean mismatch"
    assert jnp.allclose(var, var_ref, atol=5e-2, rtol=5e-2), "bf16 var mismatch"

    # f32 path: exact (zero-padding is exact), validates the kernel bitwise-close.
    prep_f32 = prepare_params(params, use_bf16=False)
    mean32, var32 = encoder_v2_forward(x, prep_f32)
    jax.block_until_ready((mean32, var32))
    assert jnp.allclose(mean32, mean_ref, atol=1e-5), "f32 mean mismatch"
    assert jnp.allclose(var32, var_ref, atol=1e-5), "f32 var mismatch"

    print("KERNEL_OK")
</pallas_src>

<mosaic_0001>
module attributes {stable_mosaic.version = 11 : i64} {
  func.func @encoder_kernel(%arg0: i32, %arg1: memref<8x32xf32, #tpu.memory_space<vmem>>, %arg2: memref<32x128xbf16, #tpu.memory_space<vmem>>, %arg3: memref<1x128xf32, #tpu.memory_space<vmem>>, %arg4: memref<128x256xbf16, #tpu.memory_space<vmem>>, %arg5: memref<1x256xf32, #tpu.memory_space<vmem>>, %arg6: memref<8x256xf32, #tpu.memory_space<vmem>>) attributes {dimension_semantics = [#tpu.dimension_semantics<parallel>], iteration_bounds = array<i64: 1>, scalar_prefetch = 0 : i64, scratch_operands = 0 : i64, tpu.core_type = #tpu.core_type<tc>, window_params = [{transform_indices = @transform_0, window_bounds = array<i64: 8, 32>}, {pipeline_mode = #tpu.pipeline_mode<synchronous>, transform_indices = @transform_1, window_bounds = array<i64: 32, 128>}, {pipeline_mode = #tpu.pipeline_mode<synchronous>, transform_indices = @transform_2, window_bounds = array<i64: 1, 128>}, {pipeline_mode = #tpu.pipeline_mode<synchronous>, transform_indices = @transform_3, window_bounds = array<i64: 128, 256>}, {pipeline_mode = #tpu.pipeline_mode<synchronous>, transform_indices = @transform_4, window_bounds = array<i64: 1, 256>}, {transform_indices = @transform_5, window_bounds = array<i64: 8, 256>}]} {
    %c0 = arith.constant 0 : index
    %c0_0 = arith.constant 0 : index
    %0 = vector.load %arg1[%c0, %c0_0] : memref<8x32xf32, #tpu.memory_space<vmem>>, vector<8x32xf32>
    %1 = arith.truncf %0 : vector<8x32xf32> to vector<8x32xbf16>
    %c0_1 = arith.constant 0 : index
    %c0_2 = arith.constant 0 : index
    %2 = vector.load %arg2[%c0_1, %c0_2] : memref<32x128xbf16, #tpu.memory_space<vmem>>, vector<32x128xbf16>
    %cst = arith.constant dense<0.000000e+00> : vector<8x128xf32>
    %3 = tpu.matmul %1, %2, %cst {dimension_numbers = #tpu.dot_dimension_numbers<[1], [0], [0], [1], [0, 0, 1, 1], [], []>} : vector<8x32xbf16>, vector<32x128xbf16>, vector<8x128xf32> -> vector<8x128xf32>
    %c0_3 = arith.constant 0 : index
    %c0_4 = arith.constant 0 : index
    %4 = vector.load %arg3[%c0_3, %c0_4] : memref<1x128xf32, #tpu.memory_space<vmem>>, vector<1x128xf32>
    %5 = vector.broadcast %4 : vector<1x128xf32> to vector<8x128xf32>
    %6 = arith.addf %3, %5 : vector<8x128xf32>
    %cst_5 = arith.constant 0.000000e+00 : f32
    %7 = vector.broadcast %cst_5 : f32 to vector<8x128xf32>
    %8 = arith.maximumf %6, %7 : vector<8x128xf32>
    %9 = arith.truncf %8 : vector<8x128xf32> to vector<8x128xbf16>
    %c0_6 = arith.constant 0 : index
    %c0_7 = arith.constant 0 : index
    %10 = vector.load %arg4[%c0_6, %c0_7] : memref<128x256xbf16, #tpu.memory_space<vmem>>, vector<128x256xbf16>
    %cst_8 = arith.constant dense<0.000000e+00> : vector<8x256xf32>
    %11 = tpu.matmul %9, %10, %cst_8 {dimension_numbers = #tpu.dot_dimension_numbers<[1], [0], [0], [1], [0, 0, 1, 1], [], []>} : vector<8x128xbf16>, vector<128x256xbf16>, vector<8x256xf32> -> vector<8x256xf32>
    %c0_9 = arith.constant 0 : index
    %c0_10 = arith.constant 0 : index
    %12 = vector.load %arg5[%c0_9, %c0_10] : memref<1x256xf32, #tpu.memory_space<vmem>>, vector<1x256xf32>
    %13 = vector.broadcast %12 : vector<1x256xf32> to vector<8x256xf32>
    %14 = arith.addf %11, %13 : vector<8x256xf32>
    %c0_11 = arith.constant 0 : index
    %c0_12 = arith.constant 0 : index
    %15 = vector.load %arg6[%c0_11, %c0_12] : memref<8x256xf32, #tpu.memory_space<vmem>>, vector<8x256xf32>
    tpu.vector_store %arg6[%c0_11, %c0_12], %14 {strides = array<i32>} : memref<8x256xf32, #tpu.memory_space<vmem>>, vector<8x256xf32>,
    return
  }
  func.func @transform_0(%arg0: i32) -> (i32, i32) {
    %c0_i32 = arith.constant 0 : i32
    %c0_i32_0 = arith.constant 0 : i32
    return %arg0, %c0_i32 : i32, i32
  }
  func.func @transform_1(%arg0: i32) -> (i32, i32) {
    %c0_i32 = arith.constant 0 : i32
    %c0_i32_0 = arith.constant 0 : i32
    %c0_i32_1 = arith.constant 0 : i32
    return %c0_i32, %c0_i32_0 : i32, i32
  }
  func.func @transform_2(%arg0: i32) -> (i32, i32) {
    %c0_i32 = arith.constant 0 : i32
    %c0_i32_0 = arith.constant 0 : i32
    %c0_i32_1 = arith.constant 0 : i32
    return %c0_i32, %c0_i32_0 : i32, i32
  }
  func.func @transform_3(%arg0: i32) -> (i32, i32) {
    %c0_i32 = arith.constant 0 : i32
    %c0_i32_0 = arith.constant 0 : i32
    %c0_i32_1 = arith.constant 0 : i32
    return %c0_i32, %c0_i32_0 : i32, i32
  }
  func.func @transform_4(%arg0: i32) -> (i32, i32) {
    %c0_i32 = arith.constant 0 : i32
    %c0_i32_0 = arith.constant 0 : i32
    %c0_i32_1 = arith.constant 0 : i32
    return %c0_i32, %c0_i32_0 : i32, i32
  }
  func.func @transform_5(%arg0: i32) -> (i32, i32) {
    %c0_i32 = arith.constant 0 : i32
    %c0_i32_0 = arith.constant 0 : i32
    return %arg0, %c0_i32 : i32, i32
  }
}

module attributes {stable_mosaic.version = 11 : i64} {
  func.func @encoder_kernel(%arg0: i32, %arg1: memref<8x32xf32, #tpu.memory_space<vmem>>, %arg2: memref<32x128xbf16, #tpu.memory_space<vmem>>, %arg3: memref<1x128xf32, #tpu.memory_space<vmem>>, %arg4: memref<128x256xbf16, #tpu.memory_space<vmem>>, %arg5: memref<1x256xf32, #tpu.memory_space<vmem>>, %arg6: memref<8x256xf32, #tpu.memory_space<vmem>>) attributes {dimension_semantics = [#tpu.dimension_semantics<parallel>], iteration_bounds = array<i64: 1>, scalar_prefetch = 0 : i64, scratch_operands = 0 : i64, tpu.core_type = #tpu.core_type<tc>, window_params = [{transform_indices = @transform_0, window_bounds = array<i64: 8, 32>}, {pipeline_mode = #tpu.pipeline_mode<synchronous>, transform_indices = @transform_1, window_bounds = array<i64: 32, 128>}, {pipeline_mode = #tpu.pipeline_mode<synchronous>, transform_indices = @transform_2, window_bounds = array<i64: 1, 128>}, {pipeline_mode = #tpu.pipeline_mode<synchronous>, transform_indices = @transform_3, window_bounds = array<i64: 128, 256>}, {pipeline_mode = #tpu.pipeline_mode<synchronous>, transform_indices = @transform_4, window_bounds = array<i64: 1, 256>}, {transform_indices = @transform_5, window_bounds = array<i64: 8, 256>}]} {
    %c0 = arith.constant 0 : index
    %c0_0 = arith.constant 0 : index
    %0 = vector.load %arg1[%c0, %c0_0] : memref<8x32xf32, #tpu.memory_space<vmem>>, vector<8x32xf32>
    %1 = arith.truncf %0 : vector<8x32xf32> to vector<8x32xbf16>
    %c0_1 = arith.constant 0 : index
    %c0_2 = arith.constant 0 : index
    %2 = vector.load %arg2[%c0_1, %c0_2] : memref<32x128xbf16, #tpu.memory_space<vmem>>, vector<32x128xbf16>
    %cst = arith.constant dense<0.000000e+00> : vector<8x128xf32>
    %3 = tpu.matmul %1, %2, %cst {dimension_numbers = #tpu.dot_dimension_numbers<[1], [0], [0], [1], [0, 0, 1, 1], [], []>} : vector<8x32xbf16>, vector<32x128xbf16>, vector<8x128xf32> -> vector<8x128xf32>
    %c0_3 = arith.constant 0 : index
    %c0_4 = arith.constant 0 : index
    %4 = vector.load %arg3[%c0_3, %c0_4] : memref<1x128xf32, #tpu.memory_space<vmem>>, vector<1x128xf32>
    %5 = vector.broadcast %4 : vector<1x128xf32> to vector<8x128xf32>
    %6 = arith.addf %3, %5 : vector<8x128xf32>
    %cst_5 = arith.constant 0.000000e+00 : f32
    %7 = vector.broadcast %cst_5 : f32 to vector<8x128xf32>
    %8 = arith.maximumf %6, %7 : vector<8x128xf32>
    %9 = arith.truncf %8 : vector<8x128xf32> to vector<8x128xbf16>
    %c0_6 = arith.constant 0 : index
    %c0_7 = arith.constant 0 : index
    %10 = vector.load %arg4[%c0_6, %c0_7] : memref<128x256xbf16, #tpu.memory_space<vmem>>, vector<128x256xbf16>
    %cst_8 = arith.constant dense<0.000000e+00> : vector<8x256xf32>
    %11 = tpu.matmul %9, %10, %cst_8 {dimension_numbers = #tpu.dot_dimension_numbers<[1], [0], [0], [1], [0, 0, 1, 1], [], []>} : vector<8x128xbf16>, vector<128x256xbf16>, vector<8x256xf32> -> vector<8x256xf32>
    %c0_9 = arith.constant 0 : index
    %c0_10 = arith.constant 0 : index
    %12 = vector.load %arg5[%c0_9, %c0_10] : memref<1x256xf32, #tpu.memory_space<vmem>>, vector<1x256xf32>
    %13 = vector.broadcast %12 : vector<1x256xf32> to vector<8x256xf32>
    %14 = arith.addf %11, %13 : vector<8x256xf32>
    %c0_11 = arith.constant 0 : index
    %c0_12 = arith.constant 0 : index
    %15 = vector.load %arg6[%c0_11, %c0_12] : memref<8x256xf32, #tpu.memory_space<vmem>>, vector<8x256xf32>
    tpu.vector_store %arg6[%c0_11, %c0_12], %14 {strides = array<i32>} : memref<8x256xf32, #tpu.memory_space<vmem>>, vector<8x256xf32>,
    return
  }
  func.func @transform_0(%arg0: i32) -> (i32, i32) {
    %c0_i32 = arith.constant 0 : i32
    %c0_i32_0 = arith.constant 0 : i32
    return %arg0, %c0_i32 : i32, i32
  }
  func.func @transform_1(%arg0: i32) -> (i32, i32) {
    %c0_i32 = arith.constant 0 : i32
    %c0_i32_0 = arith.constant 0 : i32
    %c0_i32_1 = arith.constant 0 : i32
    return %c0_i32, %c0_i32_0 : i32, i32
  }
  func.func @transform_2(%arg0: i32) -> (i32, i32) {
    %c0_i32 = arith.constant 0 : i32
    %c0_i32_0 = arith.constant 0 : i32
    %c0_i32_1 = arith.constant 0 : i32
    return %c0_i32, %c0_i32_0 : i32, i32
  }
  func.func @transform_3(%arg0: i32) -> (i32, i32) {
    %c0_i32 = arith.constant 0 : i32
    %c0_i32_0 = arith.constant 0 : i32
    %c0_i32_1 = arith.constant 0 : i32
    return %c0_i32, %c0_i32_0 : i32, i32
  }
  func.func @transform_4(%arg0: i32) -> (i32, i32) {
    %c0_i32 = arith.constant 0 : i32
    %c0_i32_0 = arith.constant 0 : i32
    %c0_i32_1 = arith.constant 0 : i32
    return %c0_i32, %c0_i32_0 : i32, i32
  }
  func.func @transform_5(%arg0: i32) -> (i32, i32) {
    %c0_i32 = arith.constant 0 : i32
    %c0_i32_0 = arith.constant 0 : i32
    return %arg0, %c0_i32 : i32, i32
  }
}

</mosaic_0001>

<llo_original>
// kernel: tpu_custom_call.1
$region0: #{tpu_custom_call.1}
  #allocation0 [shape = 'u32[]', space=smem, size = 0x4, offset = 0x4, fixed_abs, tag = 'smem constant byte address 0x4 - core index']
  #allocation1 [shape = 'u32[144,128]{1,0:T(1,128)}', space=vmem, size = 0x12000, scoped, tag = 'internal scratch']
  %s0 = inlined_call_operand.hbm [shape: f32[8,32], index: 0, kind: input, shape index: {}]
  %s1 = inlined_call_operand.hbm [shape: bf16[32,128], index: 1, kind: input, shape index: {}]
  %s2 = inlined_call_operand.vmem [shape: f32[1,128], index: 2, kind: input, shape index: {}]
  %s3 = inlined_call_operand.hbm [shape: bf16[128,256], index: 3, kind: input, shape index: {}]
  %s4 = inlined_call_operand.vmem [shape: f32[1,256], index: 4, kind: input, shape index: {}]
  %s5 = inlined_call_operand.hbm [shape: f32[8,256], index: 5, kind: output, shape index: {}]
  %s6 = sld [smem:[#allocation0]]
  $region42: #{tpu_custom_call.1} parent=0
    _
  %s8 = ssub.s32 1, %s6
  %s9 = scalar_select 0, %s8, %s6
  $region1: #{tpu_custom_call.1} parent=0
    #allocation2 [shape = 'u8[4096]{0}', space=vmem, size = 0x1000, scoped, tag = 'input window, operand 0, single buffered']
    #allocation3 [shape = 's32[1]{0}', space=sflag, size = 0x4, scoped, tag = 'scoped memory for tpu_custom_call.1']
    #allocation4 [shape = 's32[1]{0}', space=sflag, size = 0x4, scoped, tag = 'scoped memory for tpu_custom_call.1']
    #allocation5 [shape = 'u8[8192]{0}', space=vmem, size = 0x2000, scoped, tag = 'input window, operand 1, single buffered']
    #allocation6 [shape = 's32[1]{0}', space=sflag, size = 0x4, scoped, tag = 'scoped memory for tpu_custom_call.1']
    #allocation7 [shape = 'u8[65536]{0}', space=vmem, size = 0x10000, scoped, tag = 'input window, operand 3, single buffered']
    #allocation8 [shape = 'u8[8192]{0}', space=vmem, size = 0x2000, scoped, tag = 'output window, operand 0, single buffered']
    %10 = vsyncpa [#allocation3], 0
    %11 = vsyncpa [#allocation6], 0
    %12 = vsyncpa [#allocation4], 0
    // Predicated region
    $region2: #{tpu_custom_call.1} parent=1 // pred_check
      _
    $region3: #{tpu_custom_call.1} parent=1 // pred_check_branch
      %14 = sbr.rel (0) target = $region5
    $region4: #{tpu_custom_call.1} parent=1 // pred_region
      %s16 = ssub.s32 128, 128
      %17 = vsyncadd [#allocation3], %s16
      %s19 = sshll.u32 [#allocation2], 4
      %s20 = int_to_ptr.vmem [resolvable:$true] %s19
      %22 = dma.hbm_to_vmem [thread:$0]  %s0, 128, %s20, [#allocation3]
    $region5: #{tpu_custom_call.1} parent=1 // pred_fallthru
      _
    // Predicated region
    $region6: #{tpu_custom_call.1} parent=1 // pred_check
      _
    $region7: #{tpu_custom_call.1} parent=1 // pred_check_branch
      %24 = sbr.rel (0) target = $region9
    $region8: #{tpu_custom_call.1} parent=1 // pred_region
      %s26 = ssub.s32 256, 256
      %27 = vsyncadd [#allocation6], %s26
      %s28 = sshll.u32 [#allocation5], 4
      %s29 = int_to_ptr.vmem [resolvable:$true] %s28
      %34 = dma.hbm_to_vmem [thread:$0]  %s1, 256, %s29, [#allocation6], 64, 64, 4
    $region9: #{tpu_custom_call.1} parent=1 // pred_fallthru
      _
    // Predicated region
    $region10: #{tpu_custom_call.1} parent=1 // pred_check
      _
    $region11: #{tpu_custom_call.1} parent=1 // pred_check_branch
      %36 = sbr.rel (0) target = $region13
    $region12: #{tpu_custom_call.1} parent=1 // pred_region
      _
    $region13: #{tpu_custom_call.1} parent=1 // pred_fallthru
      _
    // Predicated region
    $region14: #{tpu_custom_call.1} parent=1 // pred_check
      _
    $region15: #{tpu_custom_call.1} parent=1 // pred_check_branch
      %38 = sbr.rel (0) target = $region17
    $region16: #{tpu_custom_call.1} parent=1 // pred_region
      %s40 = ssub.s32 2048, 2048
      %41 = vsyncadd [#allocation6], %s40
      %s42 = sshll.u32 [#allocation7], 4
      %s43 = int_to_ptr.vmem [resolvable:$true] %s42
      %48 = dma.hbm_to_vmem [thread:$0]  %s3, 2048, %s43, [#allocation6], 128, 128, 8
    $region17: #{tpu_custom_call.1} parent=1 // pred_fallthru
      _
    // Predicated region
    $region18: #{tpu_custom_call.1} parent=1 // pred_check
      _
    $region19: #{tpu_custom_call.1} parent=1 // pred_check_branch
      %50 = sbr.rel (0) target = $region21
    $region20: #{tpu_custom_call.1} parent=1 // pred_region
      _
    $region21: #{tpu_custom_call.1} parent=1 // pred_fallthru
      _
    // Predicated region
    $region22: #{tpu_custom_call.1} parent=1 // pred_check
      _
    $region23: #{tpu_custom_call.1} parent=1 // pred_check_branch
      %52 = sbr.rel (0) target = $region25
    $region24: #{tpu_custom_call.1} parent=1 // pred_region
      %53 = dma.done [#allocation3], 128
    $region25: #{tpu_custom_call.1} parent=1 // pred_fallthru
      _
    // Predicated region
    $region26: #{tpu_custom_call.1} parent=1 // pred_check
      _
    $region27: #{tpu_custom_call.1} parent=1 // pred_check_branch
      %55 = sbr.rel (0) target = $region29
    $region28: #{tpu_custom_call.1} parent=1 // pred_region
      %56 = dma.done [#allocation6], 256
    $region29: #{tpu_custom_call.1} parent=1 // pred_fallthru
      _
    // Predicated region
    $region30: #{tpu_custom_call.1} parent=1 // pred_check
      _
    $region31: #{tpu_custom_call.1} parent=1 // pred_check_branch
      %58 = sbr.rel (0) target = $region33
    $region32: #{tpu_custom_call.1} parent=1 // pred_region
      %59 = dma.done [#allocation6], 2048
    $region33: #{tpu_custom_call.1} parent=1 // pred_fallthru
      _
    %v61 = vld [vmem:[#allocation2] sm:$0xff]
    %v62 = vpack.c.bf16 %v61, %v61
    %v63 = vld [vmem:[#allocation5] sm:$0xf]
    %v64 = vld [vmem:[#allocation5 + $0x4] sm:$0xf]
    %v65 = vld [vmem:[#allocation5 + $0x8] sm:$0xf]
    %v66 = vld [vmem:[#allocation5 + $0xc] sm:$0xf]
    %v67 = vld [vmem:[%s2] sm:$0x1]
    %v69 = vlaneseq
    %v70 = vshrl.u32 %v69, 7
    %v71 = vsub.s32 0, %v70
    %v72 = vrot.slane %v67, %v71
    %v78 = vunpack.c.l.b16 %v63
    %v79 = vunpack.c.l.b16 %v64
    %v80 = vunpack.c.l.b16 %v65
    %v81 = vunpack.c.l.b16 %v66
    %v82 = vpack.c.b16 %v79, %v78
    %v83 = vpack.c.b16 %v81, %v80
    %vm86 = vcmask 261120
    %v88 = vsel %vm86, %v62, 0
    %90 = vmatprep.subr.bf16.mxu0 0
    %91 = vmatpush1.bf16.msra.mxu0 0
    %92 = vmatprep.subr.bf16.mxu0 0
    %93 = vmatpush1.bf16.msra.mxu0 0
    %94 = vmatprep.subr.bf16.mxu0 0
    %95 = vmatpush1.bf16.msra.mxu0 0
    %96 = vmatprep.subr.bf16.mxu0 0
    %97 = vmatpush1.bf16.msra.mxu0 0
    %98 = vmatprep.subr.bf16.mxu0 0
    %99 = vmatpush1.bf16.msra.mxu0 0
    %100 = vmatprep.subr.bf16.mxu0 0
    %101 = vmatpush1.bf16.msra.mxu0 0
    %102 = vmatprep.subr.bf16.mxu0 0
    %103 = vmatpush1.bf16.msra.mxu0 %v83
    %104 = vmatprep.subr.bf16.mxu0 0
    %105 = vmatpush1.bf16.msra.mxu0 %v82
    %106 = vmatprep.subr.bf16.mxu0 0
    %107 = vmatpush2.bf16.msra.mxu0 0
    %108 = vmatprep.subr.bf16.mxu0 0
    %109 = vmatpush2.bf16.msra.mxu0 0
    %110 = vmatprep.subr.bf16.mxu0 0
    %111 = vmatpush2.bf16.msra.mxu0 0
    %112 = vmatprep.subr.bf16.mxu0 0
    %113 = vmatpush2.bf16.msra.mxu0 0
    %114 = vmatprep.subr.bf16.mxu0 0
    %115 = vmatpush2.bf16.msra.mxu0 0
    %116 = vmatprep.subr.bf16.mxu0 0
    %117 = vmatpush2.bf16.msra.mxu0 0
    %118 = vmatprep.subr.bf16.mxu0 0
    %119 = vmatpush2.bf16.msra.mxu0 0
    %120 = vmatprep.subr.bf16.mxu0 0
    %121 = vmatpush2.bf16.msra.mxu0 0
    %122 = vmatprep.mubr.bf16.mxu0 0
    %123 = vmatmul.mubr.bf16.gmra.mxu0 %v88
    %v124 = vpop.f32.mrf.mxu0
    %v125 = vadd.f32 %v72, %v124
    %v126 = vpop.f32.mrf.mxu0
    %v127 = vpop.f32.mrf.mxu0
    %v128 = vpop.f32.mrf.mxu0
    %129 = vdwg.mxu0
    %v130 = vmax.f32 %v125, 0.0
    %v131 = vpack.c.bf16 %v130, %v130
    %v132 = vld [vmem:[#allocation7] sm:$0xff]
    %v133 = vld [vmem:[#allocation7 + $0x8] sm:$0xff]
    %v134 = vld [vmem:[#allocation7 + $0x10] sm:$0xff]
    %v135 = vld [vmem:[#allocation7 + $0x18] sm:$0xff]
    %v136 = vld [vmem:[#allocation7 + $0x20] sm:$0xff]
    %v137 = vld [vmem:[#allocation7 + $0x28] sm:$0xff]
    %v138 = vld [vmem:[#allocation7 + $0x30] sm:$0xff]
    %v139 = vld [vmem:[#allocation7 + $0x38] sm:$0xff]
    %v140 = vld [vmem:[#allocation7 + $0x40] sm:$0xff]
    %v141 = vld [vmem:[#allocation7 + $0x48] sm:$0xff]
    %v142 = vld [vmem:[#allocation7 + $0x50] sm:$0xff]
    %v143 = vld [vmem:[#allocation7 + $0x58] sm:$0xff]
    %v144 = vld [vmem:[#allocation7 + $0x60] sm:$0xff]
    %v145 = vld [vmem:[#allocation7 + $0x68] sm:$0xff]
    %v146 = vld [vmem:[#allocation7 + $0x70] sm:$0xff]
    %v147 = vld [vmem:[#allocation7 + $0x78] sm:$0xff]
    %v148 = vld [vmem:[%s4] sm:$0x3]
    %v150 = vlaneseq
    %v151 = vshrl.u32 %v150, 7
    %v152 = vsub.s32 0, %v151
    %v153 = vrot.slane %v148, %v152
    %v154 = vlaneseq
    %v155 = vshrl.u32 %v154, 7
    %v156 = vsub.s32 1, %v155
    %v157 = vrot.slane %v148, %v156
    %v176 = vunpack.c.l.b16 %v132
    %v177 = vunpack.c.h.b16 %v132
    %v178 = vunpack.c.l.b16 %v133
    %v179 = vunpack.c.h.b16 %v133
    %v180 = vunpack.c.l.b16 %v134
    %v181 = vunpack.c.h.b16 %v134
    %v182 = vunpack.c.l.b16 %v135
    %v183 = vunpack.c.h.b16 %v135
    %v184 = vunpack.c.l.b16 %v136
    %v185 = vunpack.c.h.b16 %v136
    %v186 = vunpack.c.l.b16 %v137
    %v187 = vunpack.c.h.b16 %v137
    %v188 = vunpack.c.l.b16 %v138
    %v189 = vunpack.c.h.b16 %v138
    %v190 = vunpack.c.l.b16 %v139
    %v191 = vunpack.c.h.b16 %v139
    %v192 = vunpack.c.l.b16 %v140
    %v193 = vunpack.c.h.b16 %v140
    %v194 = vunpack.c.l.b16 %v141
    %v195 = vunpack.c.h.b16 %v141
    %v196 = vunpack.c.l.b16 %v142
    %v197 = vunpack.c.h.b16 %v142
    %v198 = vunpack.c.l.b16 %v143
    %v199 = vunpack.c.h.b16 %v143
    %v200 = vunpack.c.l.b16 %v144
    %v201 = vunpack.c.h.b16 %v144
    %v202 = vunpack.c.l.b16 %v145
    %v203 = vunpack.c.h.b16 %v145
    %v204 = vunpack.c.l.b16 %v146
    %v205 = vunpack.c.h.b16 %v146
    %v206 = vunpack.c.l.b16 %v147
    %v207 = vunpack.c.h.b16 %v147
    %v208 = vpack.c.b16 %v178, %v176
    %v209 = vpack.c.b16 %v179, %v177
    %v210 = vpack.c.b16 %v182, %v180
    %v211 = vpack.c.b16 %v183, %v181
    %v212 = vpack.c.b16 %v186, %v184
    %v213 = vpack.c.b16 %v187, %v185
    %v214 = vpack.c.b16 %v190, %v188
    %v215 = vpack.c.b16 %v191, %v189
    %v216 = vpack.c.b16 %v194, %v192
    %v217 = vpack.c.b16 %v195, %v193
    %v218 = vpack.c.b16 %v198, %v196
    %v219 = vpack.c.b16 %v199, %v197
    %v220 = vpack.c.b16 %v202, %v200
    %v221 = vpack.c.b16 %v203, %v201
    %v222 = vpack.c.b16 %v206, %v204
    %v223 = vpack.c.b16 %v207, %v205
    %240 = vmatprep.subr.bf16.mxu0 %v223
    %241 = vmatpush1.bf16.msra.mxu0 %v222
    %242 = vmatprep.subr.bf16.mxu0 %v221
    %243 = vmatpush1.bf16.msra.mxu0 %v220
    %244 = vmatprep.subr.bf16.mxu0 %v219
    %245 = vmatpush1.bf16.msra.mxu0 %v218
    %246 = vmatprep.subr.bf16.mxu0 %v217
    %247 = vmatpush1.bf16.msra.mxu0 %v216
    %248 = vmatprep.subr.bf16.mxu0 %v215
    %249 = vmatpush1.bf16.msra.mxu0 %v214
    %250 = vmatprep.subr.bf16.mxu0 %v213
    %251 = vmatpush1.bf16.msra.mxu0 %v212
    %252 = vmatprep.subr.bf16.mxu0 %v211
    %253 = vmatpush1.bf16.msra.mxu0 %v210
    %254 = vmatprep.subr.bf16.mxu0 %v209
    %255 = vmatpush1.bf16.msra.mxu0 %v208
    %256 = vmatprep.subr.bf16.mxu0 0
    %257 = vmatpush2.bf16.msra.mxu0 0
    %258 = vmatprep.subr.bf16.mxu0 0
    %259 = vmatpush2.bf16.msra.mxu0 0
    %260 = vmatprep.subr.bf16.mxu0 0
    %261 = vmatpush2.bf16.msra.mxu0 0
    %262 = vmatprep.subr.bf16.mxu0 0
    %263 = vmatpush2.bf16.msra.mxu0 0
    %264 = vmatprep.subr.bf16.mxu0 0
    %265 = vmatpush2.bf16.msra.mxu0 0
    %266 = vmatprep.subr.bf16.mxu0 0
    %267 = vmatpush2.bf16.msra.mxu0 0
    %268 = vmatprep.subr.bf16.mxu0 0
    %269 = vmatpush2.bf16.msra.mxu0 0
    %270 = vmatprep.subr.bf16.mxu0 0
    %271 = vmatpush2.bf16.msra.mxu0 0
    %272 = vmatprep.mubr.bf16.mxu0 0
    %273 = vmatmul.mubr.bf16.gmra.mxu0 %v131
    %v274 = vpop.f32.mrf.mxu0
    %v275 = vadd.f32 %v153, %v274
    %v276 = vpop.f32.mrf.mxu0
    %v277 = vadd.f32 %v157, %v276
    %v278 = vpop.f32.mrf.mxu0
    %v279 = vpop.f32.mrf.mxu0
    %280 = vdwg.mxu0
    %281 = vst [vmem:[#allocation8] sm:$0xff] %v275
    %282 = vst [vmem:[#allocation8 + $0x8] sm:$0xff] %v277
    // Predicated region
    $region34: #{tpu_custom_call.1} parent=1 // pred_check
      _
    $region35: #{tpu_custom_call.1} parent=1 // pred_check_branch
      %284 = sbr.rel (0) target = $region37
    $region36: #{tpu_custom_call.1} parent=1 // pred_region
      %s286 = ssub.s32 256, 256
      %287 = vsyncadd [#allocation4], %s286
      %s289 = sshll.u32 [#allocation8], 4
      %s290 = int_to_ptr.vmem [resolvable:$true] %s289
      %292 = dma.vmem_to_hbm [thread:$0]  %s290, 256, %s5, [#allocation4]
    $region37: #{tpu_custom_call.1} parent=1 // pred_fallthru
      _
    // Predicated region
    $region38: #{tpu_custom_call.1} parent=1 // pred_check
      _
    $region39: #{tpu_custom_call.1} parent=1 // pred_check_branch
      %294 = sbr.rel (0) target = $region41
    $region40: #{tpu_custom_call.1} parent=1 // pred_region
      %295 = dma.done [#allocation4], 256
    $region41: #{tpu_custom_call.1} parent=1 // pred_fallthru
      _
    %296 = vsyncpa [#allocation3], 1
    %297 = vsyncpa [#allocation6], 1
    %298 = vsyncpa [#allocation4], 1

// kernel: tpu_custom_call.1
$region0: #{tpu_custom_call.1}
  #allocation0 [shape = 'u32[]', space=smem, size = 0x4, offset = 0x4, fixed_abs, tag = 'smem constant byte address 0x4 - core index']
  #allocation1 [shape = 'u32[144,128]{1,0:T(1,128)}', space=vmem, size = 0x12000, scoped, tag = 'internal scratch']
  %s0 = inlined_call_operand.hbm [shape: f32[8,32], index: 0, kind: input, shape index: {}]
  %s1 = inlined_call_operand.hbm [shape: bf16[32,128], index: 1, kind: input, shape index: {}]
  %s2 = inlined_call_operand.vmem [shape: f32[1,128], index: 2, kind: input, shape index: {}]
  %s3 = inlined_call_operand.hbm [shape: bf16[128,256], index: 3, kind: input, shape index: {}]
  %s4 = inlined_call_operand.vmem [shape: f32[1,256], index: 4, kind: input, shape index: {}]
  %s5 = inlined_call_operand.hbm [shape: f32[8,256], index: 5, kind: output, shape index: {}]
  %s6 = sld [smem:[#allocation0]]
  $region42: #{tpu_custom_call.1} parent=0
    _
  %s8 = ssub.s32 1, %s6
  %s9 = scalar_select 0, %s8, %s6
  $region1: #{tpu_custom_call.1} parent=0
    #allocation2 [shape = 'u8[4096]{0}', space=vmem, size = 0x1000, scoped, tag = 'input window, operand 0, single buffered']
    #allocation3 [shape = 's32[1]{0}', space=sflag, size = 0x4, scoped, tag = 'scoped memory for tpu_custom_call.1']
    #allocation4 [shape = 's32[1]{0}', space=sflag, size = 0x4, scoped, tag = 'scoped memory for tpu_custom_call.1']
    #allocation5 [shape = 'u8[8192]{0}', space=vmem, size = 0x2000, scoped, tag = 'input window, operand 1, single buffered']
    #allocation6 [shape = 's32[1]{0}', space=sflag, size = 0x4, scoped, tag = 'scoped memory for tpu_custom_call.1']
    #allocation7 [shape = 'u8[65536]{0}', space=vmem, size = 0x10000, scoped, tag = 'input window, operand 3, single buffered']
    #allocation8 [shape = 'u8[8192]{0}', space=vmem, size = 0x2000, scoped, tag = 'output window, operand 0, single buffered']
    %10 = vsyncpa [#allocation3], 0
    %11 = vsyncpa [#allocation6], 0
    %12 = vsyncpa [#allocation4], 0
    // Predicated region
    $region2: #{tpu_custom_call.1} parent=1 // pred_check
      _
    $region3: #{tpu_custom_call.1} parent=1 // pred_check_branch
      %14 = sbr.rel (0) target = $region5
    $region4: #{tpu_custom_call.1} parent=1 // pred_region
      %s16 = ssub.s32 128, 128
      %17 = vsyncadd [#allocation3], %s16
      %s19 = sshll.u32 [#allocation2], 4
      %s20 = int_to_ptr.vmem [resolvable:$true] %s19
      %22 = dma.hbm_to_vmem [thread:$0]  %s0, 128, %s20, [#allocation3]
    $region5: #{tpu_custom_call.1} parent=1 // pred_fallthru
      _
    // Predicated region
    $region6: #{tpu_custom_call.1} parent=1 // pred_check
      _
    $region7: #{tpu_custom_call.1} parent=1 // pred_check_branch
      %24 = sbr.rel (0) target = $region9
    $region8: #{tpu_custom_call.1} parent=1 // pred_region
      %s26 = ssub.s32 256, 256
      %27 = vsyncadd [#allocation6], %s26
      %s28 = sshll.u32 [#allocation5], 4
      %s29 = int_to_ptr.vmem [resolvable:$true] %s28
      %34 = dma.hbm_to_vmem [thread:$0]  %s1, 256, %s29, [#allocation6], 64, 64, 4
    $region9: #{tpu_custom_call.1} parent=1 // pred_fallthru
      _
    // Predicated region
    $region10: #{tpu_custom_call.1} parent=1 // pred_check
      _
    $region11: #{tpu_custom_call.1} parent=1 // pred_check_branch
      %36 = sbr.rel (0) target = $region13
    $region12: #{tpu_custom_call.1} parent=1 // pred_region
      _
    $region13: #{tpu_custom_call.1} parent=1 // pred_fallthru
      _
    // Predicated region
    $region14: #{tpu_custom_call.1} parent=1 // pred_check
      _
    $region15: #{tpu_custom_call.1} parent=1 // pred_check_branch
      %38 = sbr.rel (0) target = $region17
    $region16: #{tpu_custom_call.1} parent=1 // pred_region
      %s40 = ssub.s32 2048, 2048
      %41 = vsyncadd [#allocation6], %s40
      %s42 = sshll.u32 [#allocation7], 4
      %s43 = int_to_ptr.vmem [resolvable:$true] %s42
      %48 = dma.hbm_to_vmem [thread:$0]  %s3, 2048, %s43, [#allocation6], 128, 128, 8
    $region17: #{tpu_custom_call.1} parent=1 // pred_fallthru
      _
    // Predicated region
    $region18: #{tpu_custom_call.1} parent=1 // pred_check
      _
    $region19: #{tpu_custom_call.1} parent=1 // pred_check_branch
      %50 = sbr.rel (0) target = $region21
    $region20: #{tpu_custom_call.1} parent=1 // pred_region
      _
    $region21: #{tpu_custom_call.1} parent=1 // pred_fallthru
      _
    // Predicated region
    $region22: #{tpu_custom_call.1} parent=1 // pred_check
      _
    $region23: #{tpu_custom_call.1} parent=1 // pred_check_branch
      %52 = sbr.rel (0) target = $region25
    $region24: #{tpu_custom_call.1} parent=1 // pred_region
      %53 = dma.done [#allocation3], 128
    $region25: #{tpu_custom_call.1} parent=1 // pred_fallthru
      _
    // Predicated region
    $region26: #{tpu_custom_call.1} parent=1 // pred_check
      _
    $region27: #{tpu_custom_call.1} parent=1 // pred_check_branch
      %55 = sbr.rel (0) target = $region29
    $region28: #{tpu_custom_call.1} parent=1 // pred_region
      %56 = dma.done [#allocation6], 256
    $region29: #{tpu_custom_call.1} parent=1 // pred_fallthru
      _
    // Predicated region
    $region30: #{tpu_custom_call.1} parent=1 // pred_check
      _
    $region31: #{tpu_custom_call.1} parent=1 // pred_check_branch
      %58 = sbr.rel (0) target = $region33
    $region32: #{tpu_custom_call.1} parent=1 // pred_region
      %59 = dma.done [#allocation6], 2048
    $region33: #{tpu_custom_call.1} parent=1 // pred_fallthru
      _
    %v61 = vld [vmem:[#allocation2] sm:$0xff]
    %v62 = vpack.c.bf16 %v61, %v61
    %v63 = vld [vmem:[#allocation5] sm:$0xf]
    %v64 = vld [vmem:[#allocation5 + $0x4] sm:$0xf]
    %v65 = vld [vmem:[#allocation5 + $0x8] sm:$0xf]
    %v66 = vld [vmem:[#allocation5 + $0xc] sm:$0xf]
    %v67 = vld [vmem:[%s2] sm:$0x1]
    %v69 = vlaneseq
    %v70 = vshrl.u32 %v69, 7
    %v71 = vsub.s32 0, %v70
    %v72 = vrot.slane %v67, %v71
    %v78 = vunpack.c.l.b16 %v63
    %v79 = vunpack.c.l.b16 %v64
    %v80 = vunpack.c.l.b16 %v65
    %v81 = vunpack.c.l.b16 %v66
    %v82 = vpack.c.b16 %v79, %v78
    %v83 = vpack.c.b16 %v81, %v80
    %vm86 = vcmask 261120
    %v88 = vsel %vm86, %v62, 0
    %90 = vmatprep.subr.bf16.mxu0 0
    %91 = vmatpush1.bf16.msra.mxu0 0
    %92 = vmatprep.subr.bf16.mxu0 0
    %93 = vmatpush1.bf16.msra.mxu0 0
    %94 = vmatprep.subr.bf16.mxu0 0
    %95 = vmatpush1.bf16.msra.mxu0 0
    %96 = vmatprep.subr.bf16.mxu0 0
    %97 = vmatpush1.bf16.msra.mxu0 0
    %98 = vmatprep.subr.bf16.mxu0 0
    %99 = vmatpush1.bf16.msra.mxu0 0
    %100 = vmatprep.subr.bf16.mxu0 0
    %101 = vmatpush1.bf16.msra.mxu0 0
    %102 = vmatprep.subr.bf16.mxu0 0
    %103 = vmatpush1.bf16.msra.mxu0 %v83
    %104 = vmatprep.subr.bf16.mxu0 0
    %105 = vmatpush1.bf16.msra.mxu0 %v82
    %106 = vmatprep.subr.bf16.mxu0 0
    %107 = vmatpush2.bf16.msra.mxu0 0
    %108 = vmatprep.subr.bf16.mxu0 0
    %109 = vmatpush2.bf16.msra.mxu0 0
    %110 = vmatprep.subr.bf16.mxu0 0
    %111 = vmatpush2.bf16.msra.mxu0 0
    %112 = vmatprep.subr.bf16.mxu0 0
    %113 = vmatpush2.bf16.msra.mxu0 0
    %114 = vmatprep.subr.bf16.mxu0 0
    %115 = vmatpush2.bf16.msra.mxu0 0
    %116 = vmatprep.subr.bf16.mxu0 0
    %117 = vmatpush2.bf16.msra.mxu0 0
    %118 = vmatprep.subr.bf16.mxu0 0
    %119 = vmatpush2.bf16.msra.mxu0 0
    %120 = vmatprep.subr.bf16.mxu0 0
    %121 = vmatpush2.bf16.msra.mxu0 0
    %122 = vmatprep.mubr.bf16.mxu0 0
    %123 = vmatmul.mubr.bf16.gmra.mxu0 %v88
    %v124 = vpop.f32.mrf.mxu0
    %v125 = vadd.f32 %v72, %v124
    %v126 = vpop.f32.mrf.mxu0
    %v127 = vpop.f32.mrf.mxu0
    %v128 = vpop.f32.mrf.mxu0
    %129 = vdwg.mxu0
    %v130 = vmax.f32 %v125, 0.0
    %v131 = vpack.c.bf16 %v130, %v130
    %v132 = vld [vmem:[#allocation7] sm:$0xff]
    %v133 = vld [vmem:[#allocation7 + $0x8] sm:$0xff]
    %v134 = vld [vmem:[#allocation7 + $0x10] sm:$0xff]
    %v135 = vld [vmem:[#allocation7 + $0x18] sm:$0xff]
    %v136 = vld [vmem:[#allocation7 + $0x20] sm:$0xff]
    %v137 = vld [vmem:[#allocation7 + $0x28] sm:$0xff]
    %v138 = vld [vmem:[#allocation7 + $0x30] sm:$0xff]
    %v139 = vld [vmem:[#allocation7 + $0x38] sm:$0xff]
    %v140 = vld [vmem:[#allocation7 + $0x40] sm:$0xff]
    %v141 = vld [vmem:[#allocation7 + $0x48] sm:$0xff]
    %v142 = vld [vmem:[#allocation7 + $0x50] sm:$0xff]
    %v143 = vld [vmem:[#allocation7 + $0x58] sm:$0xff]
    %v144 = vld [vmem:[#allocation7 + $0x60] sm:$0xff]
    %v145 = vld [vmem:[#allocation7 + $0x68] sm:$0xff]
    %v146 = vld [vmem:[#allocation7 + $0x70] sm:$0xff]
    %v147 = vld [vmem:[#allocation7 + $0x78] sm:$0xff]
    %v148 = vld [vmem:[%s4] sm:$0x3]
    %v150 = vlaneseq
    %v151 = vshrl.u32 %v150, 7
    %v152 = vsub.s32 0, %v151
    %v153 = vrot.slane %v148, %v152
    %v154 = vlaneseq
    %v155 = vshrl.u32 %v154, 7
    %v156 = vsub.s32 1, %v155
    %v157 = vrot.slane %v148, %v156
    %v176 = vunpack.c.l.b16 %v132
    %v177 = vunpack.c.h.b16 %v132
    %v178 = vunpack.c.l.b16 %v133
    %v179 = vunpack.c.h.b16 %v133
    %v180 = vunpack.c.l.b16 %v134
    %v181 = vunpack.c.h.b16 %v134
    %v182 = vunpack.c.l.b16 %v135
    %v183 = vunpack.c.h.b16 %v135
    %v184 = vunpack.c.l.b16 %v136
    %v185 = vunpack.c.h.b16 %v136
    %v186 = vunpack.c.l.b16 %v137
    %v187 = vunpack.c.h.b16 %v137
    %v188 = vunpack.c.l.b16 %v138
    %v189 = vunpack.c.h.b16 %v138
    %v190 = vunpack.c.l.b16 %v139
    %v191 = vunpack.c.h.b16 %v139
    %v192 = vunpack.c.l.b16 %v140
    %v193 = vunpack.c.h.b16 %v140
    %v194 = vunpack.c.l.b16 %v141
    %v195 = vunpack.c.h.b16 %v141
    %v196 = vunpack.c.l.b16 %v142
    %v197 = vunpack.c.h.b16 %v142
    %v198 = vunpack.c.l.b16 %v143
    %v199 = vunpack.c.h.b16 %v143
    %v200 = vunpack.c.l.b16 %v144
    %v201 = vunpack.c.h.b16 %v144
    %v202 = vunpack.c.l.b16 %v145
    %v203 = vunpack.c.h.b16 %v145
    %v204 = vunpack.c.l.b16 %v146
    %v205 = vunpack.c.h.b16 %v146
    %v206 = vunpack.c.l.b16 %v147
    %v207 = vunpack.c.h.b16 %v147
    %v208 = vpack.c.b16 %v178, %v176
    %v209 = vpack.c.b16 %v179, %v177
    %v210 = vpack.c.b16 %v182, %v180
    %v211 = vpack.c.b16 %v183, %v181
    %v212 = vpack.c.b16 %v186, %v184
    %v213 = vpack.c.b16 %v187, %v185
    %v214 = vpack.c.b16 %v190, %v188
    %v215 = vpack.c.b16 %v191, %v189
    %v216 = vpack.c.b16 %v194, %v192
    %v217 = vpack.c.b16 %v195, %v193
    %v218 = vpack.c.b16 %v198, %v196
    %v219 = vpack.c.b16 %v199, %v197
    %v220 = vpack.c.b16 %v202, %v200
    %v221 = vpack.c.b16 %v203, %v201
    %v222 = vpack.c.b16 %v206, %v204
    %v223 = vpack.c.b16 %v207, %v205
    %240 = vmatprep.subr.bf16.mxu0 %v223
    %241 = vmatpush1.bf16.msra.mxu0 %v222
    %242 = vmatprep.subr.bf16.mxu0 %v221
    %243 = vmatpush1.bf16.msra.mxu0 %v220
    %244 = vmatprep.subr.bf16.mxu0 %v219
    %245 = vmatpush1.bf16.msra.mxu0 %v218
    %246 = vmatprep.subr.bf16.mxu0 %v217
    %247 = vmatpush1.bf16.msra.mxu0 %v216
    %248 = vmatprep.subr.bf16.mxu0 %v215
    %249 = vmatpush1.bf16.msra.mxu0 %v214
    %250 = vmatprep.subr.bf16.mxu0 %v213
    %251 = vmatpush1.bf16.msra.mxu0 %v212
    %252 = vmatprep.subr.bf16.mxu0 %v211
    %253 = vmatpush1.bf16.msra.mxu0 %v210
    %254 = vmatprep.subr.bf16.mxu0 %v209
    %255 = vmatpush1.bf16.msra.mxu0 %v208
    %256 = vmatprep.subr.bf16.mxu0 0
    %257 = vmatpush2.bf16.msra.mxu0 0
    %258 = vmatprep.subr.bf16.mxu0 0
    %259 = vmatpush2.bf16.msra.mxu0 0
    %260 = vmatprep.subr.bf16.mxu0 0
    %261 = vmatpush2.bf16.msra.mxu0 0
    %262 = vmatprep.subr.bf16.mxu0 0
    %263 = vmatpush2.bf16.msra.mxu0 0
    %264 = vmatprep.subr.bf16.mxu0 0
    %265 = vmatpush2.bf16.msra.mxu0 0
    %266 = vmatprep.subr.bf16.mxu0 0
    %267 = vmatpush2.bf16.msra.mxu0 0
    %268 = vmatprep.subr.bf16.mxu0 0
    %269 = vmatpush2.bf16.msra.mxu0 0
    %270 = vmatprep.subr.bf16.mxu0 0
    %271 = vmatpush2.bf16.msra.mxu0 0
    %272 = vmatprep.mubr.bf16.mxu0 0
    %273 = vmatmul.mubr.bf16.gmra.mxu0 %v131
    %v274 = vpop.f32.mrf.mxu0
    %v275 = vadd.f32 %v153, %v274
    %v276 = vpop.f32.mrf.mxu0
    %v277 = vadd.f32 %v157, %v276
    %v278 = vpop.f32.mrf.mxu0
    %v279 = vpop.f32.mrf.mxu0
    %280 = vdwg.mxu0
    %281 = vst [vmem:[#allocation8] sm:$0xff] %v275
    %282 = vst [vmem:[#allocation8 + $0x8] sm:$0xff] %v277
    // Predicated region
    $region34: #{tpu_custom_call.1} parent=1 // pred_check
      _
    $region35: #{tpu_custom_call.1} parent=1 // pred_check_branch
      %284 = sbr.rel (0) target = $region37
    $region36: #{tpu_custom_call.1} parent=1 // pred_region
      %s286 = ssub.s32 256, 256
      %287 = vsyncadd [#allocation4], %s286
      %s289 = sshll.u32 [#allocation8], 4
      %s290 = int_to_ptr.vmem [resolvable:$true] %s289
      %292 = dma.vmem_to_hbm [thread:$0]  %s290, 256, %s5, [#allocation4]
    $region37: #{tpu_custom_call.1} parent=1 // pred_fallthru
      _
    // Predicated region
    $region38: #{tpu_custom_call.1} parent=1 // pred_check
      _
    $region39: #{tpu_custom_call.1} parent=1 // pred_check_branch
      %294 = sbr.rel (0) target = $region41
    $region40: #{tpu_custom_call.1} parent=1 // pred_region
      %295 = dma.done [#allocation4], 256
    $region41: #{tpu_custom_call.1} parent=1 // pred_fallthru
      _
    %296 = vsyncpa [#allocation3], 1
    %297 = vsyncpa [#allocation6], 1
    %298 = vsyncpa [#allocation4], 1

</llo_original>
